<compile_context>
chip_gen: v7x
topology: tpu7x:2x2x1
jax: 0.10.0
libtpu: 0.0.40
codegen_flags: <defaults>
</compile_context>

<pallas_src>
import functools
import numpy as np
import jax
import jax.numpy as jnp
from jax import lax
from jax.experimental import pallas as pl
from jax.experimental.pallas import tpu as pltpu


def ldam_loss_kernel(x_ref, tgt_ref, m_ref, o_ref, *, s, n_valid):
    # x_ref:   [TN, C] f32 logits tile
    # tgt_ref: [TN, 1] i32 targets tile
    # m_ref:   [1,  C] f32 per-class margins (m_list)
    # o_ref:   [TN, 1] f32 per-sample losses (0 for padded rows)
    x = x_ref[...]                                        # [TN, C]
    tgt = tgt_ref[...]                                    # [TN, 1]
    m_list = m_ref[...]                                   # [1, C]

    TN, C = x.shape
    class_ids = lax.broadcasted_iota(jnp.int32, (TN, C), dimension=1)
    idx_f = (class_ids == tgt).astype(jnp.float32)        # one-hot [TN, C]

    # Fused margin subtraction: subtracting batch_m[i] at the target column
    # is identical to subtracting m_list[j] there, so no per-row reduction.
    z = (x - idx_f * m_list) * jnp.float32(s)             # scaled logits [TN, C]

    # Scaled softmax cross-entropy, all reductions kept 2-D ([TN, 1]).
    z_max = jnp.max(z, axis=1, keepdims=True)             # [TN, 1]
    sum_exp = jnp.sum(jnp.exp(z - z_max), axis=1, keepdims=True)   # [TN, 1]
    lse = z_max + jnp.log(sum_exp)                         # [TN, 1]
    z_tgt = jnp.sum(z * idx_f, axis=1, keepdims=True)      # [TN, 1]
    per_sample = lse - z_tgt                               # [TN, 1]

    # Zero out rows past the true batch size (batch padding for tiling).
    row0 = pl.program_id(0) * TN
    row_ids = row0 + lax.broadcasted_iota(jnp.int32, (TN, 1), dimension=0)
    o_ref[...] = jnp.where(row_ids < n_valid, per_sample, 0.0)


def _choose_block_rows(N, C, max_rows=1024, vmem_budget_bytes=8 * 1024 * 1024):
    """Pick a batch-tile size (multiple of 8) that double-buffers within budget."""
    # double-buffered f32 logits tile: 2 * TN * C * 4 bytes
    cap = max(8, (vmem_budget_bytes // (2 * C * 4)) // 8 * 8)
    rounded_n = ((N + 7) // 8) * 8
    return max(8, min(max_rows, cap, rounded_n))


def ldam_loss(x, target, m_list, s, *, block_rows=1024):
    """x: [N, C] f32, target: [N] int, m_list: [C] f32, s: python float."""
    x = jnp.asarray(x, jnp.float32)
    N, C = x.shape

    TN = _choose_block_rows(N, C, max_rows=block_rows)
    num_tiles = pl.cdiv(N, TN)
    N_pad = num_tiles * TN

    x_p = jnp.pad(x, ((0, N_pad - N), (0, 0)))
    tgt = jnp.pad(jnp.asarray(target, jnp.int32), (0, N_pad - N)).reshape(N_pad, 1)
    m = jnp.asarray(m_list, jnp.float32).reshape(1, C)

    kernel = functools.partial(ldam_loss_kernel, s=float(s), n_valid=N)

    per_sample = pl.pallas_call(
        kernel,
        out_shape=jax.ShapeDtypeStruct((N_pad, 1), jnp.float32),
        grid_spec=pl.GridSpec(
            grid=(num_tiles,),
            in_specs=[
                pl.BlockSpec((TN, C), lambda i: (i, 0)),   # logits tile
                pl.BlockSpec((TN, 1), lambda i: (i, 0)),   # targets tile
                pl.BlockSpec((1, C), lambda i: (0, 0)),    # m_list (replicated)
            ],
            out_specs=pl.BlockSpec((TN, 1), lambda i: (i, 0)),
        ),
        compiler_params=pltpu.CompilerParams(
            dimension_semantics=("parallel",),
            vmem_limit_bytes=64 * 1024 * 1024,
        ),
    )(x_p, tgt, m)

    return jnp.sum(per_sample) / jnp.float32(N)


def make_m_list(cls_num_list, max_m=0.5):
    m = 1.0 / np.sqrt(np.sqrt(np.asarray(cls_num_list, dtype=np.float64)))
    m = m * (max_m / np.max(m))
    return jnp.asarray(m, dtype=jnp.float32)


def _reference(x, target, m_list, s):
    N, C = x.shape
    idx = jax.nn.one_hot(target, C, dtype=jnp.float32)
    batch_m = (idx @ m_list).reshape(N, 1)
    out = jnp.where(idx > 0, x - batch_m, x) * s
    lse = jax.scipy.special.logsumexp(out, axis=1)
    return jnp.mean(lse - jnp.sum(out * idx, axis=1))


if __name__ == "__main__":
    key = jax.random.PRNGKey(0)
    s = 30.0

    # --- case 1: small single-tile problem (as in the module's typical use) ---
    N, C = 8, 16
    k1, k2, k3, k4 = jax.random.split(key, 4)
    x = jax.random.normal(k1, (N, C), dtype=jnp.float32)
    target = jax.random.randint(k2, (N,), 0, C, dtype=jnp.int32)
    cls_num_list = [1000 // (i + 1) + 1 for i in range(C)]
    m_list = make_m_list(cls_num_list, max_m=0.5)

    loss = ldam_loss(x, target, m_list, s)
    jax.block_until_ready(loss)
    ref = _reference(x, target, m_list, s)
    assert jnp.allclose(loss, ref, rtol=1e-5, atol=1e-5), (loss, ref)

    # --- case 2: multi-tile path with batch padding (exercises grid + mask) ---
    N2 = 40
    x2 = jax.random.normal(k3, (N2, C), dtype=jnp.float32)
    target2 = jax.random.randint(k4, (N2,), 0, C, dtype=jnp.int32)
    loss2 = ldam_loss(x2, target2, m_list, s, block_rows=16)
    jax.block_until_ready(loss2)
    ref2 = _reference(x2, target2, m_list, s)
    assert jnp.allclose(loss2, ref2, rtol=1e-5, atol=1e-5), (loss2, ref2)

    print("KERNEL_OK")
</pallas_src>

<mosaic_0001>
module attributes {stable_mosaic.version = 11 : i64} {
  func.func @ldam_loss_kernel(%arg0: i32, %arg1: memref<8x16xf32, #tpu.memory_space<vmem>>, %arg2: memref<8x1xi32, #tpu.memory_space<vmem>>, %arg3: memref<1x16xf32, #tpu.memory_space<vmem>>, %arg4: memref<8x1xf32, #tpu.memory_space<vmem>>) attributes {dimension_semantics = [#tpu.dimension_semantics<parallel>], iteration_bounds = array<i64: 1>, scalar_prefetch = 0 : i64, scratch_operands = 0 : i64, tpu.core_type = #tpu.core_type<tc>, window_params = [{transform_indices = @transform_0, window_bounds = array<i64: 8, 16>}, {transform_indices = @transform_1, window_bounds = array<i64: 8, 1>}, {pipeline_mode = #tpu.pipeline_mode<synchronous>, transform_indices = @transform_2, window_bounds = array<i64: 1, 16>}, {transform_indices = @transform_3, window_bounds = array<i64: 8, 1>}]} {
    %c0 = arith.constant 0 : index
    %c0_0 = arith.constant 0 : index
    %0 = vector.load %arg1[%c0, %c0_0] : memref<8x16xf32, #tpu.memory_space<vmem>>, vector<8x16xf32>
    %c0_1 = arith.constant 0 : index
    %c0_2 = arith.constant 0 : index
    %1 = vector.load %arg2[%c0_1, %c0_2] : memref<8x1xi32, #tpu.memory_space<vmem>>, vector<8x1xi32>
    %c0_3 = arith.constant 0 : index
    %c0_4 = arith.constant 0 : index
    %2 = vector.load %arg3[%c0_3, %c0_4] : memref<1x16xf32, #tpu.memory_space<vmem>>, vector<1x16xf32>
    %3 = tpu.iota {dimensions = array<i32: 1>} : vector<8x16xi32>
    %4 = vector.broadcast %1 : vector<8x1xi32> to vector<8x16xi32>
    %5 = arith.cmpi eq, %3, %4 : vector<8x16xi32>
    %6 = arith.extui %5 : vector<8x16xi1> to vector<8x16xi32>
    %7 = arith.sitofp %6 : vector<8x16xi32> to vector<8x16xf32>
    %8 = vector.broadcast %2 : vector<1x16xf32> to vector<8x16xf32>
    %9 = arith.mulf %7, %8 : vector<8x16xf32>
    %10 = arith.subf %0, %9 : vector<8x16xf32>
    %cst = arith.constant 3.000000e+01 : f32
    %11 = vector.broadcast %cst : f32 to vector<8x16xf32>
    %12 = arith.mulf %10, %11 : vector<8x16xf32>
    %cst_5 = arith.constant dense<0xFF800000> : vector<8xf32>
    %13 = vector.multi_reduction <maximumf>, %12, %cst_5 [1] : vector<8x16xf32> to vector<8xf32>
    %14 = vector.shape_cast %13 : vector<8xf32> to vector<8x1xf32>
    %15 = vector.broadcast %14 : vector<8x1xf32> to vector<8x16xf32>
    %16 = arith.subf %12, %15 : vector<8x16xf32>
    %17 = math.exp %16 : vector<8x16xf32>
    %cst_6 = arith.constant dense<0.000000e+00> : vector<8xf32>
    %18 = vector.multi_reduction <add>, %17, %cst_6 [1] : vector<8x16xf32> to vector<8xf32>
    %19 = vector.shape_cast %18 : vector<8xf32> to vector<8x1xf32>
    %20 = math.log %19 : vector<8x1xf32>
    %21 = arith.addf %14, %20 : vector<8x1xf32>
    %22 = arith.mulf %12, %7 : vector<8x16xf32>
    %cst_7 = arith.constant dense<0.000000e+00> : vector<8xf32>
    %23 = vector.multi_reduction <add>, %22, %cst_7 [1] : vector<8x16xf32> to vector<8xf32>
    %24 = vector.shape_cast %23 : vector<8xf32> to vector<8x1xf32>
    %25 = arith.subf %21, %24 : vector<8x1xf32>
    %c8_i32 = arith.constant 8 : i32
    %26 = arith.muli %arg0, %c8_i32 : i32
    %27 = tpu.iota {dimensions = array<i32: 0>} : vector<8x1xi32>
    %28 = vector.broadcast %26 : i32 to vector<8x1xi32>
    %29 = arith.addi %28, %27 : vector<8x1xi32>
    %c8_i32_8 = arith.constant 8 : i32
    %30 = vector.broadcast %c8_i32_8 : i32 to vector<8x1xi32>
    %31 = arith.cmpi slt, %29, %30 : vector<8x1xi32>
    %cst_9 = arith.constant 0.000000e+00 : f32
    %32 = vector.broadcast %cst_9 : f32 to vector<8x1xf32>
    %33 = arith.select %31, %25, %32 : vector<8x1xi1>, vector<8x1xf32>
    %c0_10 = arith.constant 0 : index
    %c0_11 = arith.constant 0 : index
    %34 = vector.load %arg4[%c0_10, %c0_11] : memref<8x1xf32, #tpu.memory_space<vmem>>, vector<8x1xf32>
    tpu.vector_store %arg4[%c0_10, %c0_11], %33 {strides = array<i32>} : memref<8x1xf32, #tpu.memory_space<vmem>>, vector<8x1xf32>,
    return
  }
  func.func @transform_0(%arg0: i32) -> (i32, i32) {
    %c0_i32 = arith.constant 0 : i32
    %c0_i32_0 = arith.constant 0 : i32
    return %arg0, %c0_i32 : i32, i32
  }
  func.func @transform_1(%arg0: i32) -> (i32, i32) {
    %c0_i32 = arith.constant 0 : i32
    %c0_i32_0 = arith.constant 0 : i32
    return %arg0, %c0_i32 : i32, i32
  }
  func.func @transform_2(%arg0: i32) -> (i32, i32) {
    %c0_i32 = arith.constant 0 : i32
    %c0_i32_0 = arith.constant 0 : i32
    %c0_i32_1 = arith.constant 0 : i32
    return %c0_i32, %c0_i32_0 : i32, i32
  }
  func.func @transform_3(%arg0: i32) -> (i32, i32) {
    %c0_i32 = arith.constant 0 : i32
    %c0_i32_0 = arith.constant 0 : i32
    return %arg0, %c0_i32 : i32, i32
  }
}

</mosaic_0001>

<llo_original>
// kernel: tpu_custom_call.1
$region0: #{tpu_custom_call.1}
  #allocation0 [shape = 'u32[]', space=smem, size = 0x4, offset = 0x4, fixed_abs, tag = 'smem constant byte address 0x4 - core index']
  #allocation1 [shape = 'u32[144,128]{1,0:T(1,128)}', space=vmem, size = 0x12000, scoped, tag = 'internal scratch']
  %s0 = inlined_call_operand.hbm [shape: f32[8,16], index: 0, kind: input, shape index: {}]
  %s1 = inlined_call_operand.hbm [shape: s32[8,1], index: 1, kind: input, shape index: {}]
  %s2 = inlined_call_operand.hbm [shape: f32[1,16], index: 2, kind: input, shape index: {}]
  %s3 = inlined_call_operand.hbm [shape: f32[8,1], index: 3, kind: output, shape index: {}]
  %s4 = sld [smem:[#allocation0]]
  $region34: #{tpu_custom_call.1} parent=0
    _
  %s6 = ssub.s32 1, %s4
  %s7 = scalar_select 0, %s6, %s4
  $region1: #{tpu_custom_call.1} parent=0
    #allocation2 [shape = 'u8[4096]{0}', space=vmem, size = 0x1000, scoped, tag = 'input window, operand 0, single buffered']
    #allocation3 [shape = 's32[1]{0}', space=sflag, size = 0x4, scoped, tag = 'scoped memory for tpu_custom_call.1']
    #allocation4 [shape = 's32[1]{0}', space=sflag, size = 0x4, scoped, tag = 'scoped memory for tpu_custom_call.1']
    #allocation5 [shape = 'u8[4096]{0}', space=vmem, size = 0x1000, scoped, tag = 'input window, operand 1, single buffered']
    #allocation6 [shape = 's32[1]{0}', space=sflag, size = 0x4, scoped, tag = 'scoped memory for tpu_custom_call.1']
    #allocation7 [shape = 'u8[512]{0}', space=vmem, size = 0x400, scoped, tag = 'input window, operand 2, single buffered']
    #allocation8 [shape = 'u8[4096]{0}', space=vmem, size = 0x1000, scoped, tag = 'output window, operand 0, single buffered']
    %8 = vsyncpa [#allocation3], 0
    %9 = vsyncpa [#allocation6], 0
    %10 = vsyncpa [#allocation4], 0
    // Predicated region
    $region2: #{tpu_custom_call.1} parent=1 // pred_check
      _
    $region3: #{tpu_custom_call.1} parent=1 // pred_check_branch
      %12 = sbr.rel (0) target = $region5
    $region4: #{tpu_custom_call.1} parent=1 // pred_region
      %s14 = ssub.s32 128, 128
      %15 = vsyncadd [#allocation3], %s14
      %s17 = sshll.u32 [#allocation2], 4
      %s18 = int_to_ptr.vmem [resolvable:$true] %s17
      %20 = dma.hbm_to_vmem [thread:$0]  %s0, 128, %s18, [#allocation3]
    $region5: #{tpu_custom_call.1} parent=1 // pred_fallthru
      _
    // Predicated region
    $region6: #{tpu_custom_call.1} parent=1 // pred_check
      _
    $region7: #{tpu_custom_call.1} parent=1 // pred_check_branch
      %22 = sbr.rel (0) target = $region9
    $region8: #{tpu_custom_call.1} parent=1 // pred_region
      %s24 = ssub.s32 128, 128
      %25 = vsyncadd [#allocation6], %s24
      %s27 = sshll.u32 [#allocation5], 4
      %s28 = int_to_ptr.vmem [resolvable:$true] %s27
      %30 = dma.hbm_to_vmem [thread:$0]  %s1, 128, %s28, [#allocation6]
    $region9: #{tpu_custom_call.1} parent=1 // pred_fallthru
      _
    // Predicated region
    $region10: #{tpu_custom_call.1} parent=1 // pred_check
      _
    $region11: #{tpu_custom_call.1} parent=1 // pred_check_branch
      %32 = sbr.rel (0) target = $region13
    $region12: #{tpu_custom_call.1} parent=1 // pred_region
      %s34 = ssub.s32 16, 16
      %35 = vsyncadd [#allocation6], %s34
      %s37 = sshll.u32 [#allocation7], 4
      %s38 = int_to_ptr.vmem [resolvable:$true] %s37
      %40 = dma.hbm_to_vmem [thread:$0]  %s2, 16, %s38, [#allocation6]
    $region13: #{tpu_custom_call.1} parent=1 // pred_fallthru
      _
    // Predicated region
    $region14: #{tpu_custom_call.1} parent=1 // pred_check
      _
    $region15: #{tpu_custom_call.1} parent=1 // pred_check_branch
      %42 = sbr.rel (0) target = $region17
    $region16: #{tpu_custom_call.1} parent=1 // pred_region
      %43 = dma.done [#allocation3], 128
    $region17: #{tpu_custom_call.1} parent=1 // pred_fallthru
      _
    // Predicated region
    $region18: #{tpu_custom_call.1} parent=1 // pred_check
      _
    $region19: #{tpu_custom_call.1} parent=1 // pred_check_branch
      %45 = sbr.rel (0) target = $region21
    $region20: #{tpu_custom_call.1} parent=1 // pred_region
      %46 = dma.done [#allocation6], 128
    $region21: #{tpu_custom_call.1} parent=1 // pred_fallthru
      _
    // Predicated region
    $region22: #{tpu_custom_call.1} parent=1 // pred_check
      _
    $region23: #{tpu_custom_call.1} parent=1 // pred_check_branch
      %48 = sbr.rel (0) target = $region25
    $region24: #{tpu_custom_call.1} parent=1 // pred_region
      %49 = dma.done [#allocation6], 16
    $region25: #{tpu_custom_call.1} parent=1 // pred_fallthru
      _
    %v50 = vld [vmem:[#allocation2] sm:$0xff]
    %v51 = vld [vmem:[#allocation5] sm:$0xff]
    %v52 = vld [vmem:[#allocation7] sm:$0x1]
    %v53 = vlaneseq
    %v54 = vand.u32 %v53, 127
    %55 = vset.pattern.permute.xlu0 0
    %56 = vperm.xlu0 %55, %v51
    %v57 = vpop.permute.xlu0 %56
    %vm58 = vcmp.eq.s32.totalorder %v54, %v57
    %v59 = vsel %vm58, 1, 0
    %v60 = vcvt.s32.f32 %v59
    %v62 = vlaneseq
    %v63 = vshrl.u32 %v62, 7
    %v64 = vsub.s32 0, %v63
    %v65 = vrot.slane %v52, %v64
    %v67 = vmul.f32 %v60, %v65
    %v68 = vsub.f32 %v50, %v67
    %v69 = vmul.f32 %v68, 30.0
    %vm70 = vcmask 130048
    %v71 = vsel %vm70, %v69, -inf
    %72 = vmax.xlane.f32.xlu0 %v71
    %v73 = vpop.xlane.xlu0 %72
    %v74 = vsub.f32 %v69, %v73
    %v75 = vmul.f32 %v74, 1.442695
    %v76 = vpow.pop %v75
    %v77 = vsel %vm70, %v76, 0.0
    %78 = vadd.xlane.f32.xlu0 %v77
    %v79 = vpop.xlane.xlu0 %78
    %v80 = vlog2.pop %v79
    %v81 = vmul.f32 %v80, 0.6931472
    %v82 = vadd.f32 %v73, %v81
    %v83 = vmul.f32 %v69, %v60
    %v84 = vsel %vm70, %v83, 0.0
    %85 = vadd.xlane.f32.xlu0 %v84
    %v86 = vpop.xlane.xlu0 %85
    %v87 = vsub.f32 %v82, %v86
    %s88 = smul.u32 0, 8
    %v89 = vlaneseq
    %v90 = vshrl.u32 %v89, 7
    %v91 = vstv %s88
    %v92 = vadd.s32 %v91, %v90
    %vm93 = vcmp.lt.s32.totalorder %v92, 8
    %v94 = vsel %vm93, %v87, 0.0
    %vm95 = vcmask 7168
    %96 = vst.msk [vmem:[#allocation8] sm:$0xff] %vm95, %v94
    // Predicated region
    $region26: #{tpu_custom_call.1} parent=1 // pred_check
      _
    $region27: #{tpu_custom_call.1} parent=1 // pred_check_branch
      %98 = sbr.rel (0) target = $region29
    $region28: #{tpu_custom_call.1} parent=1 // pred_region
      %s100 = ssub.s32 128, 128
      %101 = vsyncadd [#allocation4], %s100
      %s103 = sshll.u32 [#allocation8], 4
      %s104 = int_to_ptr.vmem [resolvable:$true] %s103
      %106 = dma.vmem_to_hbm [thread:$0]  %s104, 128, %s3, [#allocation4]
    $region29: #{tpu_custom_call.1} parent=1 // pred_fallthru
      _
    // Predicated region
    $region30: #{tpu_custom_call.1} parent=1 // pred_check
      _
    $region31: #{tpu_custom_call.1} parent=1 // pred_check_branch
      %108 = sbr.rel (0) target = $region33
    $region32: #{tpu_custom_call.1} parent=1 // pred_region
      %109 = dma.done [#allocation4], 128
    $region33: #{tpu_custom_call.1} parent=1 // pred_fallthru
      _
    %110 = vsyncpa [#allocation3], 1
    %111 = vsyncpa [#allocation6], 1
    %112 = vsyncpa [#allocation4], 1

</llo_original>
